<compile_context>
chip_gen: v5e
topology: v5e:2x2
jax: 0.10.0
libtpu: 0.0.40
codegen_flags: <defaults>
</compile_context>

<pallas_src>
import functools

import jax
import jax.numpy as jnp
from jax.experimental import pallas as pl
from jax.experimental.pallas import tpu as pltpu


def _gated_attention_kernel(x_ref, c_ref,
                            wq_ref, bq_ref,
                            wkv_ref, bv_ref,
                            wr_ref,
                            g_ref, beta_ref,
                            o_ref,
                            *, eps, mxu_dtype):
    bt, lx, d = x_ref.shape
    _, lc, _ = c_ref.shape

    x = x_ref[...]                                         # (bt, lx, d)
    x2 = x.reshape(bt * lx, d).astype(mxu_dtype)           # pack batches into MXU rows
    c2 = c_ref[...].reshape(bt * lc, d).astype(mxu_dtype)

    # q = tanh(x @ Wq + bq): all bt batches in one (bt*lx, d) matmul, f32 accumulation.
    q2 = jnp.tanh(jnp.dot(x2, wq_ref[...], preferred_element_type=jnp.float32)
                  + bq_ref[...])                           # (bt*lx, d) f32
    q3 = q2.reshape(bt, lx, d)

    # Fused c projection: c @ [Wk | Wv/sqrt(d)] in a single matmul
    # (deflator and the values-bias scaling are folded in at prep time).
    kv = jnp.dot(c2, wkv_ref[...], preferred_element_type=jnp.float32)   # (bt*lc, 2d)
    k3 = jnp.tanh(kv[:, :d]).reshape(bt, lc, d)
    v3 = (kv[:, d:] + bv_ref[...]).reshape(bt, lc, d)

    # weight_reduce is linear with no bias, so reduce(q_i + k_j) = reduce(q_i) + reduce(k_j).
    wr = wr_ref[...]                                       # (1, d) f32
    qr = jnp.sum(q3 * wr, axis=-1, keepdims=True)          # (bt, lx, 1)  VPU mul + lane reduce
    wr_b = jnp.broadcast_to(wr.reshape(1, 1, d), (bt, 1, d))
    kr = jnp.einsum('bed,bld->bel', wr_b, k3,
                    preferred_element_type=jnp.float32)    # (bt, 1, lc) lane-major, no transpose
    w = jnp.maximum(jnp.tanh(qr + kr), 0.0)                # (bt, lx, lc)
    # TODO(synk): optional `mask` multiply not wired in (forward is called with mask=None).

    # add = w @ v ; residual + LayerNorm (one-pass mean / mean-of-squares), all f32.
    add = jnp.einsum('bql,bld->bqd',
                     w.astype(mxu_dtype), v3.astype(mxu_dtype),
                     preferred_element_type=jnp.float32)   # (bt, lx, d)
    y = x.astype(jnp.float32) + add
    mean = jnp.mean(y, axis=-1, keepdims=True)
    meansq = jnp.mean(y * y, axis=-1, keepdims=True)
    var = meansq - mean * mean
    yhat = (y - mean) * jax.lax.rsqrt(var + eps)
    o_ref[...] = (yhat * g_ref[...] + beta_ref[...]).astype(o_ref.dtype)


def _choose_batch_tile(batch, lx, lc, d, target_rows=512, vmem_budget=8 << 20):
    """Largest divisor of `batch` such that bt*lx stays near `target_rows` MXU rows
    while the (double-buffered) x/c/out blocks stay inside a conservative VMEM budget."""
    # bytes per batch element for the pipelined blocks (x, c, out), double-buffered.
    bytes_per_b = (2 * lx * d + lc * d) * 4 * 2
    cap_vmem = max(1, vmem_budget // max(bytes_per_b, 1))
    want = max(1, min(target_rows // max(lx, 1), cap_vmem))
    bt = 1
    for cand in range(1, batch + 1):
        if batch % cand == 0 and cand <= want:
            bt = cand
    return bt


def gated_attention_pallas(x, c, params, *, eps=1e-5,
                           mxu_dtype=jnp.float32, batch_tile=None):
    B, Lx, D = x.shape
    Bc, Lc, Dc = c.shape
    assert Bc == B and Dc == D

    deflator = 1.0 / float(D) ** 0.5

    # --- parameter prep (fusion / folding happens once, outside the kernel) ---
    # Fuse the two c-side projections and fold the 1/sqrt(D) deflator into Wv / bv.
    wkv = jnp.concatenate([params["wk"], params["wv"] * deflator], axis=1)  # (D, 2D)
    wq = params["wq"].astype(mxu_dtype)
    wkv = wkv.astype(mxu_dtype)
    bq = params["bq"].reshape(1, D).astype(jnp.float32)
    bv = (params["bv"] * deflator).reshape(1, D).astype(jnp.float32)
    wr = params["wr"].reshape(1, D).astype(jnp.float32)      # row form, no in-kernel transpose
    gamma = params["gamma"].reshape(1, D).astype(jnp.float32)
    beta = params["beta"].reshape(1, D).astype(jnp.float32)

    bt = batch_tile if batch_tile is not None else _choose_batch_tile(B, Lx, Lc, D)
    assert B % bt == 0, "batch_tile must divide the batch"

    kernel = functools.partial(_gated_attention_kernel, eps=eps, mxu_dtype=mxu_dtype)

    # Grid-invariant operands: untiled, resident in VMEM (no double-buffering).
    wspec = pl.BlockSpec(memory_space=pltpu.MemorySpace.VMEM)

    wbytes = int(jnp.dtype(mxu_dtype).itemsize)
    cost = pl.CostEstimate(
        flops=int(B * (2 * Lx * D * D            # x @ Wq
                       + 2 * Lc * D * 2 * D      # c @ [Wk | Wv]
                       + 2 * (Lx + Lc) * D       # qr / kr reduces
                       + 2 * Lx * Lc * D)),      # w @ v
        transcendentals=int(B * ((Lx + Lc) * D + Lx * Lc)),
        bytes_accessed=int(4 * B * (2 * Lx * D + Lc * D)
                           + wbytes * 3 * D * D + 4 * 5 * D),
    )

    return pl.pallas_call(
        kernel,
        out_shape=jax.ShapeDtypeStruct((B, Lx, D), jnp.float32),
        grid=(B // bt,),
        in_specs=[
            pl.BlockSpec((bt, Lx, D), lambda b: (b, 0, 0)),   # x
            pl.BlockSpec((bt, Lc, D), lambda b: (b, 0, 0)),   # c
            wspec,   # Wq        (D, D)
            wspec,   # bq        (1, D)
            wspec,   # [Wk|Wv/√D](D, 2D)
            wspec,   # bv/√D     (1, D)
            wspec,   # w_reduce  (1, D)
            wspec,   # ln gamma  (1, D)
            wspec,   # ln beta   (1, D)
        ],
        out_specs=pl.BlockSpec((bt, Lx, D), lambda b: (b, 0, 0)),
        compiler_params=pltpu.CompilerParams(
            dimension_semantics=("parallel",),
            vmem_limit_bytes=32 * 1024 * 1024),
        cost_estimate=cost,
    )(x, c, wq, bq, wkv, bv, wr, gamma, beta)


def gated_attention_reference(x, c, params):
    """Pure-JAX reference mirroring the PyTorch forward (mask=None, no dropout)."""
    D = x.shape[-1]
    deflator = 1.0 / float(D) ** 0.5
    q = jnp.tanh(x @ params["wq"] + params["bq"])[..., :, None, :]   # (B,Lx,1,D)
    k = jnp.tanh(c @ params["wk"])[..., None, :, :]                  # (B,1,Lc,D)
    w = jax.nn.relu(jnp.tanh((q + k) @ params["wr"]))[..., 0]        # (B,Lx,Lc)
    v = (c @ params["wv"] + params["bv"]) * deflator                 # (B,Lc,D)
    add = jnp.einsum("bql,bld->bqd", w, v)
    y = x + add
    mean = jnp.mean(y, axis=-1, keepdims=True)
    var = jnp.mean((y - mean) ** 2, axis=-1, keepdims=True)
    return (y - mean) / jnp.sqrt(var + 1e-5) * params["gamma"] + params["beta"]


def init_params(key, dim):
    ks = jax.random.split(key, 6)
    scale = 1.0 / float(dim) ** 0.5
    return {
        "wq": jax.random.uniform(ks[0], (dim, dim), jnp.float32, -scale, scale),
        "bq": jax.random.uniform(ks[1], (1, dim), jnp.float32, -scale, scale),
        "wk": jax.random.uniform(ks[2], (dim, dim), jnp.float32, -scale, scale),
        "wr": jax.random.uniform(ks[3], (dim, 1), jnp.float32, -scale, scale),
        "wv": jax.random.uniform(ks[4], (dim, dim), jnp.float32, -scale, scale),
        "bv": jax.random.uniform(ks[5], (1, dim), jnp.float32, -scale, scale),
        "gamma": jnp.ones((1, dim), jnp.float32),
        "beta": jnp.zeros((1, dim), jnp.float32),
    }


if __name__ == "__main__":
    # D = 128 keeps every block lane-dense (last dim = one full vreg lane width).
    B, Lx, Lc, D = 2, 8, 8, 128
    key = jax.random.PRNGKey(0)
    kx, kc, kp = jax.random.split(key, 3)
    x = jax.random.normal(kx, (B, Lx, D), jnp.float32)
    c = jax.random.normal(kc, (B, Lc, D), jnp.float32)
    params = init_params(kp, D)

    ref = gated_attention_reference(x, c, params)

    # f32 MXU path: tight match vs. the pure-JAX reference.
    out = jax.block_until_ready(gated_attention_pallas(x, c, params))
    assert out.shape == (B, Lx, D)
    assert jnp.allclose(out, ref, atol=2e-4, rtol=2e-4), "f32 kernel mismatch vs reference"

    # bf16-on-MXU path (v6e/v7x fast path): f32 accumulation, f32 gating/LayerNorm.
    out_bf16 = jax.block_until_ready(
        gated_attention_pallas(x, c, params, mxu_dtype=jnp.bfloat16))
    assert jnp.allclose(out_bf16, ref, atol=5e-2, rtol=5e-2), "bf16 kernel mismatch vs reference"

    print("KERNEL_OK")
</pallas_src>

<mosaic_0001>
module attributes {stable_mosaic.version = 11 : i64} {
  func.func @_gated_attention_kernel(%arg0: i32, %arg1: memref<2x8x128xf32, #tpu.memory_space<vmem>>, %arg2: memref<2x8x128xf32, #tpu.memory_space<vmem>>, %arg3: memref<128x128xf32, #tpu.memory_space<vmem>>, %arg4: memref<1x128xf32, #tpu.memory_space<vmem>>, %arg5: memref<128x256xf32, #tpu.memory_space<vmem>>, %arg6: memref<1x128xf32, #tpu.memory_space<vmem>>, %arg7: memref<1x128xf32, #tpu.memory_space<vmem>>, %arg8: memref<1x128xf32, #tpu.memory_space<vmem>>, %arg9: memref<1x128xf32, #tpu.memory_space<vmem>>, %arg10: memref<2x8x128xf32, #tpu.memory_space<vmem>>) attributes {dimension_semantics = [#tpu.dimension_semantics<parallel>], iteration_bounds = array<i64: 1>, scalar_prefetch = 0 : i64, scratch_operands = 0 : i64, tpu.core_type = #tpu.core_type<tc>, window_params = [{transform_indices = @transform_0, window_bounds = array<i64: 2, 8, 128>}, {transform_indices = @transform_1, window_bounds = array<i64: 2, 8, 128>}, {pipeline_mode = #tpu.pipeline_mode<synchronous>, transform_indices = @transform_2, window_bounds = array<i64: 128, 128>}, {pipeline_mode = #tpu.pipeline_mode<synchronous>, transform_indices = @transform_3, window_bounds = array<i64: 1, 128>}, {pipeline_mode = #tpu.pipeline_mode<synchronous>, transform_indices = @transform_4, window_bounds = array<i64: 128, 256>}, {pipeline_mode = #tpu.pipeline_mode<synchronous>, transform_indices = @transform_5, window_bounds = array<i64: 1, 128>}, {pipeline_mode = #tpu.pipeline_mode<synchronous>, transform_indices = @transform_6, window_bounds = array<i64: 1, 128>}, {pipeline_mode = #tpu.pipeline_mode<synchronous>, transform_indices = @transform_7, window_bounds = array<i64: 1, 128>}, {pipeline_mode = #tpu.pipeline_mode<synchronous>, transform_indices = @transform_8, window_bounds = array<i64: 1, 128>}, {transform_indices = @transform_9, window_bounds = array<i64: 2, 8, 128>}]} {
    %c0 = arith.constant 0 : index
    %c0_0 = arith.constant 0 : index
    %c0_1 = arith.constant 0 : index
    %0 = vector.load %arg1[%c0, %c0_0, %c0_1] : memref<2x8x128xf32, #tpu.memory_space<vmem>>, vector<2x8x128xf32>
    %1 = vector.shape_cast %0 : vector<2x8x128xf32> to vector<16x128xf32>
    %c0_2 = arith.constant 0 : index
    %c0_3 = arith.constant 0 : index
    %c0_4 = arith.constant 0 : index
    %2 = vector.load %arg2[%c0_2, %c0_3, %c0_4] : memref<2x8x128xf32, #tpu.memory_space<vmem>>, vector<2x8x128xf32>
    %3 = vector.shape_cast %2 : vector<2x8x128xf32> to vector<16x128xf32>
    %c0_5 = arith.constant 0 : index
    %c0_6 = arith.constant 0 : index
    %4 = vector.load %arg3[%c0_5, %c0_6] : memref<128x128xf32, #tpu.memory_space<vmem>>, vector<128x128xf32>
    %cst = arith.constant dense<0.000000e+00> : vector<16x128xf32>
    %5 = tpu.matmul %1, %4, %cst {dimension_numbers = #tpu.dot_dimension_numbers<[1], [0], [0], [1], [0, 0, 1, 1], [], []>} : vector<16x128xf32>, vector<128x128xf32>, vector<16x128xf32> -> vector<16x128xf32>
    %c0_7 = arith.constant 0 : index
    %c0_8 = arith.constant 0 : index
    %6 = vector.load %arg4[%c0_7, %c0_8] : memref<1x128xf32, #tpu.memory_space<vmem>>, vector<1x128xf32>
    %7 = vector.broadcast %6 : vector<1x128xf32> to vector<16x128xf32>
    %8 = arith.addf %5, %7 : vector<16x128xf32>
    %9 = math.tanh %8 : vector<16x128xf32>
    %10 = vector.shape_cast %9 : vector<16x128xf32> to vector<2x8x128xf32>
    %c0_9 = arith.constant 0 : index
    %c0_10 = arith.constant 0 : index
    %11 = vector.load %arg5[%c0_9, %c0_10] : memref<128x256xf32, #tpu.memory_space<vmem>>, vector<128x256xf32>
    %cst_11 = arith.constant dense<0.000000e+00> : vector<16x256xf32>
    %12 = tpu.matmul %3, %11, %cst_11 {dimension_numbers = #tpu.dot_dimension_numbers<[1], [0], [0], [1], [0, 0, 1, 1], [], []>} : vector<16x128xf32>, vector<128x256xf32>, vector<16x256xf32> -> vector<16x256xf32>
    %13 = vector.extract_strided_slice %12 {offsets = [0, 0], sizes = [16, 128], strides = [1, 1]} : vector<16x256xf32> to vector<16x128xf32>
    %14 = math.tanh %13 : vector<16x128xf32>
    %15 = vector.shape_cast %14 : vector<16x128xf32> to vector<2x8x128xf32>
    %16 = vector.extract_strided_slice %12 {offsets = [0, 128], sizes = [16, 128], strides = [1, 1]} : vector<16x256xf32> to vector<16x128xf32>
    %c0_12 = arith.constant 0 : index
    %c0_13 = arith.constant 0 : index
    %17 = vector.load %arg6[%c0_12, %c0_13] : memref<1x128xf32, #tpu.memory_space<vmem>>, vector<1x128xf32>
    %18 = vector.broadcast %17 : vector<1x128xf32> to vector<16x128xf32>
    %19 = arith.addf %16, %18 : vector<16x128xf32>
    %20 = vector.shape_cast %19 : vector<16x128xf32> to vector<2x8x128xf32>
    %c0_14 = arith.constant 0 : index
    %c0_15 = arith.constant 0 : index
    %21 = vector.load %arg7[%c0_14, %c0_15] : memref<1x128xf32, #tpu.memory_space<vmem>>, vector<1x128xf32>
    %22 = vector.shape_cast %21 : vector<1x128xf32> to vector<1x1x128xf32>
    %23 = vector.broadcast %22 : vector<1x1x128xf32> to vector<2x8x128xf32>
    %24 = arith.mulf %10, %23 : vector<2x8x128xf32>
    %cst_16 = arith.constant dense<0.000000e+00> : vector<2x8xf32>
    %25 = vector.multi_reduction <add>, %24, %cst_16 [2] : vector<2x8x128xf32> to vector<2x8xf32>
    %26 = vector.shape_cast %25 : vector<2x8xf32> to vector<2x8x1xf32>
    %27 = vector.shape_cast %21 : vector<1x128xf32> to vector<1x1x128xf32>
    %28 = vector.shape_cast %27 : vector<1x1x128xf32> to vector<1x1x128xf32>
    %29 = vector.broadcast %28 : vector<1x1x128xf32> to vector<2x1x128xf32>
    "tpu.trace_start"() <{level = 10 : i32, message = "bed,bld->bel"}> : () -> ()
    %cst_17 = arith.constant dense<0.000000e+00> : vector<2x1x8xf32>
    %30 = tpu.matmul %29, %15, %cst_17 {dimension_numbers = #tpu.dot_dimension_numbers<[2], [2], [1], [1], [0, 0, 0, 1, 1, 1], [0], [0]>} : vector<2x1x128xf32>, vector<2x8x128xf32>, vector<2x1x8xf32> -> vector<2x1x8xf32>
    "tpu.trace_stop"() : () -> ()
    %31 = vector.broadcast %26 : vector<2x8x1xf32> to vector<2x8x8xf32>
    %32 = vector.broadcast %30 : vector<2x1x8xf32> to vector<2x8x8xf32>
    %33 = arith.addf %31, %32 : vector<2x8x8xf32>
    %34 = math.tanh %33 : vector<2x8x8xf32>
    %cst_18 = arith.constant 0.000000e+00 : f32
    %35 = vector.broadcast %cst_18 : f32 to vector<2x8x8xf32>
    %36 = arith.maximumf %34, %35 : vector<2x8x8xf32>
    "tpu.trace_start"() <{level = 10 : i32, message = "bql,bld->bqd"}> : () -> ()
    %cst_19 = arith.constant dense<0.000000e+00> : vector<2x8x128xf32>
    %37 = tpu.matmul %36, %20, %cst_19 {dimension_numbers = #tpu.dot_dimension_numbers<[2], [1], [1], [2], [0, 0, 0, 1, 1, 2], [0], [0]>} : vector<2x8x8xf32>, vector<2x8x128xf32>, vector<2x8x128xf32> -> vector<2x8x128xf32>
    "tpu.trace_stop"() : () -> ()
    %38 = arith.addf %0, %37 : vector<2x8x128xf32>
    %cst_20 = arith.constant dense<0.000000e+00> : vector<2x8xf32>
    %39 = vector.multi_reduction <add>, %38, %cst_20 [2] : vector<2x8x128xf32> to vector<2x8xf32>
    %40 = vector.shape_cast %39 : vector<2x8xf32> to vector<2x8x1xf32>
    %cst_21 = arith.constant 1.280000e+02 : f32
    %41 = vector.broadcast %cst_21 : f32 to vector<2x8x1xf32>
    %42 = arith.divf %40, %41 : vector<2x8x1xf32>
    %43 = arith.mulf %38, %38 : vector<2x8x128xf32>
    %cst_22 = arith.constant dense<0.000000e+00> : vector<2x8xf32>
    %44 = vector.multi_reduction <add>, %43, %cst_22 [2] : vector<2x8x128xf32> to vector<2x8xf32>
    %45 = vector.shape_cast %44 : vector<2x8xf32> to vector<2x8x1xf32>
    %cst_23 = arith.constant 1.280000e+02 : f32
    %46 = vector.broadcast %cst_23 : f32 to vector<2x8x1xf32>
    %47 = arith.divf %45, %46 : vector<2x8x1xf32>
    %48 = arith.mulf %42, %42 : vector<2x8x1xf32>
    %49 = arith.subf %47, %48 : vector<2x8x1xf32>
    %50 = vector.broadcast %42 : vector<2x8x1xf32> to vector<2x8x128xf32>
    %51 = arith.subf %38, %50 : vector<2x8x128xf32>
    %cst_24 = arith.constant 9.99999974E-6 : f32
    %52 = vector.broadcast %cst_24 : f32 to vector<2x8x1xf32>
    %53 = arith.addf %49, %52 : vector<2x8x1xf32>
    %54 = math.rsqrt %53 : vector<2x8x1xf32>
    %55 = vector.broadcast %54 : vector<2x8x1xf32> to vector<2x8x128xf32>
    %56 = arith.mulf %51, %55 : vector<2x8x128xf32>
    %c0_25 = arith.constant 0 : index
    %c0_26 = arith.constant 0 : index
    %57 = vector.load %arg8[%c0_25, %c0_26] : memref<1x128xf32, #tpu.memory_space<vmem>>, vector<1x128xf32>
    %58 = vector.shape_cast %57 : vector<1x128xf32> to vector<1x1x128xf32>
    %59 = vector.broadcast %58 : vector<1x1x128xf32> to vector<2x8x128xf32>
    %60 = arith.mulf %56, %59 : vector<2x8x128xf32>
    %c0_27 = arith.constant 0 : index
    %c0_28 = arith.constant 0 : index
    %61 = vector.load %arg9[%c0_27, %c0_28] : memref<1x128xf32, #tpu.memory_space<vmem>>, vector<1x128xf32>
    %62 = vector.shape_cast %61 : vector<1x128xf32> to vector<1x1x128xf32>
    %63 = vector.broadcast %62 : vector<1x1x128xf32> to vector<2x8x128xf32>
    %64 = arith.addf %60, %63 : vector<2x8x128xf32>
    %c0_29 = arith.constant 0 : index
    %c0_30 = arith.constant 0 : index
    %c0_31 = arith.constant 0 : index
    %65 = vector.load %arg10[%c0_29, %c0_30, %c0_31] : memref<2x8x128xf32, #tpu.memory_space<vmem>>, vector<2x8x128xf32>
    tpu.vector_store %arg10[%c0_29, %c0_30, %c0_31], %64 {strides = array<i32>} : memref<2x8x128xf32, #tpu.memory_space<vmem>>, vector<2x8x128xf32>,
    return
  }
  func.func @transform_0(%arg0: i32) -> (i32, i32, i32) {
    %c0_i32 = arith.constant 0 : i32
    %c0_i32_0 = arith.constant 0 : i32
    %c0_i32_1 = arith.constant 0 : i32
    return %arg0, %c0_i32, %c0_i32_0 : i32, i32, i32
  }
  func.func @transform_1(%arg0: i32) -> (i32, i32, i32) {
    %c0_i32 = arith.constant 0 : i32
    %c0_i32_0 = arith.constant 0 : i32
    %c0_i32_1 = arith.constant 0 : i32
    return %arg0, %c0_i32, %c0_i32_0 : i32, i32, i32
  }
  func.func @transform_2(%arg0: i32) -> (i32, i32) {
    %c0_i32 = arith.constant 0 : i32
    %c0_i32_0 = arith.constant 0 : i32
    %c0_i32_1 = arith.constant 0 : i32
    return %c0_i32, %c0_i32_0 : i32, i32
  }
  func.func @transform_3(%arg0: i32) -> (i32, i32) {
    %c0_i32 = arith.constant 0 : i32
    %c0_i32_0 = arith.constant 0 : i32
    %c0_i32_1 = arith.constant 0 : i32
    return %c0_i32, %c0_i32_0 : i32, i32
  }
  func.func @transform_4(%arg0: i32) -> (i32, i32) {
    %c0_i32 = arith.constant 0 : i32
    %c0_i32_0 = arith.constant 0 : i32
    %c0_i32_1 = arith.constant 0 : i32
    return %c0_i32, %c0_i32_0 : i32, i32
  }
  func.func @transform_5(%arg0: i32) -> (i32, i32) {
    %c0_i32 = arith.constant 0 : i32
    %c0_i32_0 = arith.constant 0 : i32
    %c0_i32_1 = arith.constant 0 : i32
    return %c0_i32, %c0_i32_0 : i32, i32
  }
  func.func @transform_6(%arg0: i32) -> (i32, i32) {
    %c0_i32 = arith.constant 0 : i32
    %c0_i32_0 = arith.constant 0 : i32
    %c0_i32_1 = arith.constant 0 : i32
    return %c0_i32, %c0_i32_0 : i32, i32
  }
  func.func @transform_7(%arg0: i32) -> (i32, i32) {
    %c0_i32 = arith.constant 0 : i32
    %c0_i32_0 = arith.constant 0 : i32
    %c0_i32_1 = arith.constant 0 : i32
    return %c0_i32, %c0_i32_0 : i32, i32
  }
  func.func @transform_8(%arg0: i32) -> (i32, i32) {
    %c0_i32 = arith.constant 0 : i32
    %c0_i32_0 = arith.constant 0 : i32
    %c0_i32_1 = arith.constant 0 : i32
    return %c0_i32, %c0_i32_0 : i32, i32
  }
  func.func @transform_9(%arg0: i32) -> (i32, i32, i32) {
    %c0_i32 = arith.constant 0 : i32
    %c0_i32_0 = arith.constant 0 : i32
    %c0_i32_1 = arith.constant 0 : i32
    return %arg0, %c0_i32, %c0_i32_0 : i32, i32, i32
  }
}

</mosaic_0001>

<llo_original>
// kernel: tpu_custom_call.1
$region0: #{tpu_custom_call.1}
  #allocation0 [shape = 'u32[]', space=smem, size = 0x4, offset = 0x4, fixed_abs, tag = 'smem constant byte address 0x4 - core index']
  #allocation1 [shape = 'u32[72,128]{1,0:T(1,128)}', space=vmem, size = 0x9000, scoped, tag = 'internal scratch']
  %s0 = inlined_call_operand.hbm [shape: f32[2,8,128], index: 0, kind: input, shape index: {}]
  %s1 = inlined_call_operand.hbm [shape: f32[2,8,128], index: 1, kind: input, shape index: {}]
  %s2 = inlined_call_operand.hbm [shape: f32[128,128], index: 2, kind: input, shape index: {}]
  %s3 = inlined_call_operand.vmem [shape: f32[1,128], index: 3, kind: input, shape index: {}]
  %s4 = inlined_call_operand.hbm [shape: f32[128,256], index: 4, kind: input, shape index: {}]
  %s5 = inlined_call_operand.vmem [shape: f32[1,128], index: 5, kind: input, shape index: {}]
  %s6 = inlined_call_operand.vmem [shape: f32[1,128], index: 6, kind: input, shape index: {}]
  %s7 = inlined_call_operand.vmem [shape: f32[1,128], index: 7, kind: input, shape index: {}]
  %s8 = inlined_call_operand.vmem [shape: f32[1,128], index: 8, kind: input, shape index: {}]
  %s9 = inlined_call_operand.hbm [shape: f32[2,8,128], index: 9, kind: output, shape index: {}]
  %s10 = sld [smem:[#allocation0]]
  $region62: #{tpu_custom_call.1} parent=0
    _
  %s12 = ssub.s32 1, %s10
  %s13 = scalar_select 0, %s12, %s10
  $region1: #{tpu_custom_call.1} parent=0
    #allocation2 [shape = 'u8[8192]{0}', space=vmem, size = 0x2000, scoped, tag = 'input window, operand 0, single buffered']
    #allocation3 [shape = 's32[1]{0}', space=sflag, size = 0x4, scoped, tag = 'scoped memory for tpu_custom_call.1']
    #allocation4 [shape = 's32[1]{0}', space=sflag, size = 0x4, scoped, tag = 'scoped memory for tpu_custom_call.1']
    #allocation5 [shape = 'u8[8192]{0}', space=vmem, size = 0x2000, scoped, tag = 'input window, operand 1, single buffered']
    #allocation6 [shape = 's32[1]{0}', space=sflag, size = 0x4, scoped, tag = 'scoped memory for tpu_custom_call.1']
    #allocation7 [shape = 'u8[65536]{0}', space=vmem, size = 0x10000, scoped, tag = 'input window, operand 2, single buffered']
    #allocation8 [shape = 'u8[131072]{0}', space=vmem, size = 0x20000, scoped, tag = 'input window, operand 4, single buffered']
    #allocation9 [shape = 's32[1]{0}', space=sflag, size = 0x4, scoped, tag = 'scoped memory for tpu_custom_call.1']
    #allocation10 [shape = 'u8[8192]{0}', space=vmem, size = 0x2000, scoped, tag = 'output window, operand 0, single buffered']
    %14 = vsyncpa [#allocation3], 0
    %15 = vsyncpa [#allocation6], 0
    %16 = vsyncpa [#allocation9], 0
    %17 = vsyncpa [#allocation4], 0
    // Predicated region
    $region2: #{tpu_custom_call.1} parent=1 // pred_check
      _
    $region3: #{tpu_custom_call.1} parent=1 // pred_check_branch
      %19 = sbr.rel (0) target = $region5
    $region4: #{tpu_custom_call.1} parent=1 // pred_region
      %21 = vsyncadd [#allocation3], 0
      %s22 = sshll.u32 %s0, 4
      %s23 = int_to_ptr.hbm [resolvable:$true] %s22
      %s24 = sshll.u32 [#allocation2], 4
      %s25 = int_to_ptr.vmem [resolvable:$true] %s24
      %30 = dma.hbm_to_vmem [thread:$0]  %s23, 256, %s25, [#allocation3], 128, 128, 8
    $region5: #{tpu_custom_call.1} parent=1 // pred_fallthru
      _
    // Predicated region
    $region6: #{tpu_custom_call.1} parent=1 // pred_check
      _
    $region7: #{tpu_custom_call.1} parent=1 // pred_check_branch
      %32 = sbr.rel (0) target = $region9
    $region8: #{tpu_custom_call.1} parent=1 // pred_region
      %34 = vsyncadd [#allocation6], 0
      %s35 = sshll.u32 %s1, 4
      %s36 = int_to_ptr.hbm [resolvable:$true] %s35
      %s37 = sshll.u32 [#allocation5], 4
      %s38 = int_to_ptr.vmem [resolvable:$true] %s37
      %43 = dma.hbm_to_vmem [thread:$0]  %s36, 256, %s38, [#allocation6], 128, 128, 8
    $region9: #{tpu_custom_call.1} parent=1 // pred_fallthru
      _
    // Predicated region
    $region10: #{tpu_custom_call.1} parent=1 // pred_check
      _
    $region11: #{tpu_custom_call.1} parent=1 // pred_check_branch
      %45 = sbr.rel (0) target = $region13
    $region12: #{tpu_custom_call.1} parent=1 // pred_region
      %47 = vsyncadd [#allocation6], 0
      %s48 = sshll.u32 %s2, 4
      %s49 = int_to_ptr.hbm [resolvable:$true] %s48
      %s50 = sshll.u32 [#allocation7], 4
      %s51 = int_to_ptr.vmem [resolvable:$true] %s50
      %56 = dma.hbm_to_vmem [thread:$0]  %s49, 2048, %s51, [#allocation6], 128, 128, 8
    $region13: #{tpu_custom_call.1} parent=1 // pred_fallthru
      _
    // Predicated region
    $region14: #{tpu_custom_call.1} parent=1 // pred_check
      _
    $region15: #{tpu_custom_call.1} parent=1 // pred_check_branch
      %58 = sbr.rel (0) target = $region17
    $region16: #{tpu_custom_call.1} parent=1 // pred_region
      _
    $region17: #{tpu_custom_call.1} parent=1 // pred_fallthru
      _
    // Predicated region
    $region18: #{tpu_custom_call.1} parent=1 // pred_check
      _
    $region19: #{tpu_custom_call.1} parent=1 // pred_check_branch
      %60 = sbr.rel (0) target = $region21
    $region20: #{tpu_custom_call.1} parent=1 // pred_region
      %62 = vsyncadd [#allocation9], 0
      %s63 = sshll.u32 %s4, 4
      %s64 = int_to_ptr.hbm [resolvable:$true] %s63
      %s65 = sshll.u32 [#allocation8], 4
      %s66 = int_to_ptr.vmem [resolvable:$true] %s65
      %71 = dma.hbm_to_vmem [thread:$0]  %s64, 4096, %s66, [#allocation9], 256, 256, 16
    $region21: #{tpu_custom_call.1} parent=1 // pred_fallthru
      _
    // Predicated region
    $region22: #{tpu_custom_call.1} parent=1 // pred_check
      _
    $region23: #{tpu_custom_call.1} parent=1 // pred_check_branch
      %73 = sbr.rel (0) target = $region25
    $region24: #{tpu_custom_call.1} parent=1 // pred_region
      _
    $region25: #{tpu_custom_call.1} parent=1 // pred_fallthru
      _
    // Predicated region
    $region26: #{tpu_custom_call.1} parent=1 // pred_check
      _
    $region27: #{tpu_custom_call.1} parent=1 // pred_check_branch
      %75 = sbr.rel (0) target = $region29
    $region28: #{tpu_custom_call.1} parent=1 // pred_region
      _
    $region29: #{tpu_custom_call.1} parent=1 // pred_fallthru
      _
    // Predicated region
    $region30: #{tpu_custom_call.1} parent=1 // pred_check
      _
    $region31: #{tpu_custom_call.1} parent=1 // pred_check_branch
      %77 = sbr.rel (0) target = $region33
    $region32: #{tpu_custom_call.1} parent=1 // pred_region
      _
    $region33: #{tpu_custom_call.1} parent=1 // pred_fallthru
      _
    // Predicated region
    $region34: #{tpu_custom_call.1} parent=1 // pred_check
      _
    $region35: #{tpu_custom_call.1} parent=1 // pred_check_branch
      %79 = sbr.rel (0) target = $region37
    $region36: #{tpu_custom_call.1} parent=1 // pred_region
      _
    $region37: #{tpu_custom_call.1} parent=1 // pred_fallthru
      _
    // Predicated region
    $region38: #{tpu_custom_call.1} parent=1 // pred_check
      _
    $region39: #{tpu_custom_call.1} parent=1 // pred_check_branch
      %81 = sbr.rel (0) target = $region41
    $region40: #{tpu_custom_call.1} parent=1 // pred_region
      %83 = dma.done [#allocation3], 256
    $region41: #{tpu_custom_call.1} parent=1 // pred_fallthru
      _
    // Predicated region
    $region42: #{tpu_custom_call.1} parent=1 // pred_check
      _
    $region43: #{tpu_custom_call.1} parent=1 // pred_check_branch
      %85 = sbr.rel (0) target = $region45
    $region44: #{tpu_custom_call.1} parent=1 // pred_region
      %87 = dma.done [#allocation6], 256
    $region45: #{tpu_custom_call.1} parent=1 // pred_fallthru
      _
    // Predicated region
    $region46: #{tpu_custom_call.1} parent=1 // pred_check
      _
    $region47: #{tpu_custom_call.1} parent=1 // pred_check_branch
      %89 = sbr.rel (0) target = $region49
    $region48: #{tpu_custom_call.1} parent=1 // pred_region
      %91 = dma.done [#allocation6], 2048
    $region49: #{tpu_custom_call.1} parent=1 // pred_fallthru
      _
    // Predicated region
    $region50: #{tpu_custom_call.1} parent=1 // pred_check
      _
    $region51: #{tpu_custom_call.1} parent=1 // pred_check_branch
      %93 = sbr.rel (0) target = $region53
    $region52: #{tpu_custom_call.1} parent=1 // pred_region
      %95 = dma.done [#allocation9], 4096
    $region53: #{tpu_custom_call.1} parent=1 // pred_fallthru
      _
    %v96 = vld [vmem:[#allocation2] sm:$0xff]
    %v97 = vld [vmem:[#allocation2 + $0x8] sm:$0xff]
    %v98 = vld [vmem:[#allocation5] sm:$0xff]
    %v99 = vld [vmem:[#allocation5 + $0x8] sm:$0xff]
    %v100 = vld [vmem:[#allocation7] sm:$0xff]
    %v101 = vld [vmem:[#allocation7 + $0x8] sm:$0xff]
    %v102 = vld [vmem:[#allocation7 + $0x10] sm:$0xff]
    %v103 = vld [vmem:[#allocation7 + $0x18] sm:$0xff]
    %v104 = vld [vmem:[#allocation7 + $0x20] sm:$0xff]
    %v105 = vld [vmem:[#allocation7 + $0x28] sm:$0xff]
    %v106 = vld [vmem:[#allocation7 + $0x30] sm:$0xff]
    %v107 = vld [vmem:[#allocation7 + $0x38] sm:$0xff]
    %v108 = vld [vmem:[#allocation7 + $0x40] sm:$0xff]
    %v109 = vld [vmem:[#allocation7 + $0x48] sm:$0xff]
    %v110 = vld [vmem:[#allocation7 + $0x50] sm:$0xff]
    %v111 = vld [vmem:[#allocation7 + $0x58] sm:$0xff]
    %v112 = vld [vmem:[#allocation7 + $0x60] sm:$0xff]
    %v113 = vld [vmem:[#allocation7 + $0x68] sm:$0xff]
    %v114 = vld [vmem:[#allocation7 + $0x70] sm:$0xff]
    %v115 = vld [vmem:[#allocation7 + $0x78] sm:$0xff]
    %v116 = vld [vmem:[%s3] sm:$0x1]
    %v118 = vperm.slane %v116, 0
    %120 = vmatpush.msra.mxu0 %v115
    %121 = vmatpush.msra.mxu0 %v114
    %122 = vmatpush.msra.mxu0 %v113
    %123 = vmatpush.msra.mxu0 %v112
    %124 = vmatpush.msra.mxu0 %v111
    %125 = vmatpush.msra.mxu0 %v110
    %126 = vmatpush.msra.mxu0 %v109
    %127 = vmatpush.msra.mxu0 %v108
    %128 = vmatpush.msra.mxu0 %v107
    %129 = vmatpush.msra.mxu0 %v106
    %130 = vmatpush.msra.mxu0 %v105
    %131 = vmatpush.msra.mxu0 %v104
    %132 = vmatpush.msra.mxu0 %v103
    %133 = vmatpush.msra.mxu0 %v102
    %134 = vmatpush.msra.mxu0 %v101
    %135 = vmatpush.msra.mxu0 %v100
    %136 = vmatmul.f32.gmra.mxu0 %v96
    %v137 = vpop.f32.mrf.mxu0
    %v138 = vadd.f32 %v118, %v137
    %139 = vmatmul.f32.gmra.mxu0 %v97
    %v140 = vpop.f32.mrf.mxu0
    %v141 = vadd.f32 %v118, %v140
    %142 = vdwg.mxu0
    %v143 = vtanh.pop %v138
    %v144 = vtanh.pop %v141
    %v145 = vld [vmem:[#allocation8] sm:$0xff]
    %v146 = vld [vmem:[#allocation8 + $0x8] sm:$0xff]
    %v147 = vld [vmem:[#allocation8 + $0x10] sm:$0xff]
    %v148 = vld [vmem:[#allocation8 + $0x18] sm:$0xff]
    %v149 = vld [vmem:[#allocation8 + $0x20] sm:$0xff]
    %v150 = vld [vmem:[#allocation8 + $0x28] sm:$0xff]
    %v151 = vld [vmem:[#allocation8 + $0x30] sm:$0xff]
    %v152 = vld [vmem:[#allocation8 + $0x38] sm:$0xff]
    %v153 = vld [vmem:[#allocation8 + $0x40] sm:$0xff]
    %v154 = vld [vmem:[#allocation8 + $0x48] sm:$0xff]
    %v155 = vld [vmem:[#allocation8 + $0x50] sm:$0xff]
    %v156 = vld [vmem:[#allocation8 + $0x58] sm:$0xff]
    %v157 = vld [vmem:[#allocation8 + $0x60] sm:$0xff]
    %v158 = vld [vmem:[#allocation8 + $0x68] sm:$0xff]
    %v159 = vld [vmem:[#allocation8 + $0x70] sm:$0xff]
    %v160 = vld [vmem:[#allocation8 + $0x78] sm:$0xff]
    %v161 = vld [vmem:[#allocation8 + $0x80] sm:$0xff]
    %v162 = vld [vmem:[#allocation8 + $0x88] sm:$0xff]
    %v163 = vld [vmem:[#allocation8 + $0x90] sm:$0xff]
    %v164 = vld [vmem:[#allocation8 + $0x98] sm:$0xff]
    %v165 = vld [vmem:[#allocation8 + $0xa0] sm:$0xff]
    %v166 = vld [vmem:[#allocation8 + $0xa8] sm:$0xff]
    %v167 = vld [vmem:[#allocation8 + $0xb0] sm:$0xff]
    %v168 = vld [vmem:[#allocation8 + $0xb8] sm:$0xff]
    %v169 = vld [vmem:[#allocation8 + $0xc0] sm:$0xff]
    %v170 = vld [vmem:[#allocation8 + $0xc8] sm:$0xff]
    %v171 = vld [vmem:[#allocation8 + $0xd0] sm:$0xff]
    %v172 = vld [vmem:[#allocation8 + $0xd8] sm:$0xff]
    %v173 = vld [vmem:[#allocation8 + $0xe0] sm:$0xff]
    %v174 = vld [vmem:[#allocation8 + $0xe8] sm:$0xff]
    %v175 = vld [vmem:[#allocation8 + $0xf0] sm:$0xff]
    %v176 = vld [vmem:[#allocation8 + $0xf8] sm:$0xff]
    %177 = vmatpush.msra.mxu0 %v175
    %178 = vmatpush.msra.mxu0 %v173
    %179 = vmatpush.msra.mxu0 %v171
    %180 = vmatpush.msra.mxu0 %v169
    %181 = vmatpush.msra.mxu0 %v167
    %182 = vmatpush.msra.mxu0 %v165
    %183 = vmatpush.msra.mxu0 %v163
    %184 = vmatpush.msra.mxu0 %v161
    %185 = vmatpush.msra.mxu0 %v159
    %186 = vmatpush.msra.mxu0 %v157
    %187 = vmatpush.msra.mxu0 %v155
    %188 = vmatpush.msra.mxu0 %v153
    %189 = vmatpush.msra.mxu0 %v151
    %190 = vmatpush.msra.mxu0 %v149
    %191 = vmatpush.msra.mxu0 %v147
    %192 = vmatpush.msra.mxu0 %v145
    %193 = vmatmul.f32.gmra.mxu0 %v98
    %v194 = vpop.f32.mrf.mxu0
    %v195 = vadd.f32 0.0, %v194
    %196 = vmatmul.f32.gmra.mxu0 %v99
    %v197 = vpop.f32.mrf.mxu0
    %v198 = vadd.f32 0.0, %v197
    %199 = vdwg.mxu0
    %200 = vmatpush.msra.mxu0 %v176
    %201 = vmatpush.msra.mxu0 %v174
    %202 = vmatpush.msra.mxu0 %v172
    %203 = vmatpush.msra.mxu0 %v170
    %204 = vmatpush.msra.mxu0 %v168
    %205 = vmatpush.msra.mxu0 %v166
    %206 = vmatpush.msra.mxu0 %v164
    %207 = vmatpush.msra.mxu0 %v162
    %208 = vmatpush.msra.mxu0 %v160
    %209 = vmatpush.msra.mxu0 %v158
    %210 = vmatpush.msra.mxu0 %v156
    %211 = vmatpush.msra.mxu0 %v154
    %212 = vmatpush.msra.mxu0 %v152
    %213 = vmatpush.msra.mxu0 %v150
    %214 = vmatpush.msra.mxu0 %v148
    %215 = vmatpush.msra.mxu0 %v146
    %216 = vmatmul.f32.gmra.mxu0 %v98
    %v217 = vpop.f32.mrf.mxu0
    %v218 = vadd.f32 0.0, %v217
    %219 = vmatmul.f32.gmra.mxu0 %v99
    %v220 = vpop.f32.mrf.mxu0
    %v221 = vadd.f32 0.0, %v220
    %222 = vdwg.mxu0
    %v223 = vtanh.pop %v195
    %v224 = vtanh.pop %v198
    %v225 = vld [vmem:[%s5] sm:$0x1]
    %v227 = vperm.slane %v225, 0
    %v229 = vadd.f32 %v218, %v227
    %v230 = vadd.f32 %v221, %v227
    %v231 = vld [vmem:[%s6] sm:$0x1]
    %v233 = vperm.slane %v231, 0
    %v235 = vmul.f32 %v143, %v233
    %v236 = vmul.f32 %v144, %v233
    %237 = vadd.xlane.f32.xlu0 %v235
    %v238 = vpop.xlane.xlu0 %237
    %239 = vadd.xlane.f32.xlu0 %v236
    %v240 = vpop.xlane.xlu0 %239
    %241 = vmatpush.xpose.msra.mxu0 0.0
    %242 = vmatpush.xpose.msra.mxu0 0.0
    %243 = vmatpush.xpose.msra.mxu0 0.0
    %244 = vmatpush.xpose.msra.mxu0 0.0
    %245 = vmatpush.xpose.msra.mxu0 0.0
    %246 = vmatpush.xpose.msra.mxu0 0.0
    %247 = vmatpush.xpose.msra.mxu0 0.0
    %248 = vmatpush.xpose.msra.mxu0 0.0
    %249 = vmatpush.xpose.msra.mxu0 0.0
    %250 = vmatpush.xpose.msra.mxu0 0.0
    %251 = vmatpush.xpose.msra.mxu0 0.0
    %252 = vmatpush.xpose.msra.mxu0 0.0
    %253 = vmatpush.xpose.msra.mxu0 0.0
    %254 = vmatpush.xpose.msra.mxu0 0.0
    %255 = vmatpush.xpose.msra.mxu0 0.0
    %256 = vmatpush.xpose.msra.mxu0 %v223
    %257 = vmatmul.f32.gmra.mxu0 %v231
    %v258 = vpop.f32.mrf.mxu0
    %v259 = vadd.f32 0.0, %v258
    %260 = vdwg.mxu0
    %261 = vmatpush.xpose.msra.mxu0 0.0
    %262 = vmatpush.xpose.msra.mxu0 0.0
    %263 = vmatpush.xpose.msra.mxu0 0.0
    %264 = vmatpush.xpose.msra.mxu0 0.0
    %265 = vmatpush.xpose.msra.mxu0 0.0
    %266 = vmatpush.xpose.msra.mxu0 0.0
    %267 = vmatpush.xpose.msra.mxu0 0.0
    %268 = vmatpush.xpose.msra.mxu0 0.0
    %269 = vmatpush.xpose.msra.mxu0 0.0
    %270 = vmatpush.xpose.msra.mxu0 0.0
    %271 = vmatpush.xpose.msra.mxu0 0.0
    %272 = vmatpush.xpose.msra.mxu0 0.0
    %273 = vmatpush.xpose.msra.mxu0 0.0
    %274 = vmatpush.xpose.msra.mxu0 0.0
    %275 = vmatpush.xpose.msra.mxu0 0.0
    %276 = vmatpush.xpose.msra.mxu0 %v224
    %277 = vmatmul.f32.gmra.mxu0 %v231
    %v278 = vpop.f32.mrf.mxu0
    %v279 = vadd.f32 0.0, %v278
    %280 = vdwg.mxu0
    %v281 = vperm.slane %v259, 0
    %v282 = vperm.slane %v279, 0
    %v283 = vadd.f32 %v238, %v281
    %v284 = vadd.f32 %v240, %v282
    %v285 = vtanh.pop %v283
    %v286 = vtanh.pop %v284
    %v287 = vmax.f32 %v285, 0.0
    %v288 = vmax.f32 %v286, 0.0
    %vm289 = vcmask 64512
    %v291 = vsel %vm289, %v287, 0
    %293 = vmatpush.msra.mxu0 0.0
    %294 = vmatpush.msra.mxu0 0.0
    %295 = vmatpush.msra.mxu0 0.0
    %296 = vmatpush.msra.mxu0 0.0
    %297 = vmatpush.msra.mxu0 0.0
    %298 = vmatpush.msra.mxu0 0.0
    %299 = vmatpush.msra.mxu0 0.0
    %300 = vmatpush.msra.mxu0 0.0
    %301 = vmatpush.msra.mxu0 0.0
    %302 = vmatpush.msra.mxu0 0.0
    %303 = vmatpush.msra.mxu0 0.0
    %304 = vmatpush.msra.mxu0 0.0
    %305 = vmatpush.msra.mxu0 0.0
    %306 = vmatpush.msra.mxu0 0.0
    %307 = vmatpush.msra.mxu0 0.0
    %308 = vmatpush.msra.mxu0 %v229
    %309 = vmatmul.f32.gmra.mxu0 %v291
    %v310 = vpop.f32.mrf.mxu0
    %v311 = vadd.f32 0.0, %v310
    %312 = vdwg.mxu0
    %v314 = vsel %vm289, %v288, 0
    %316 = vmatpush.msra.mxu0 0.0
    %317 = vmatpush.msra.mxu0 0.0
    %318 = vmatpush.msra.mxu0 0.0
    %319 = vmatpush.msra.mxu0 0.0
    %320 = vmatpush.msra.mxu0 0.0
    %321 = vmatpush.msra.mxu0 0.0
    %322 = vmatpush.msra.mxu0 0.0
    %323 = vmatpush.msra.mxu0 0.0
    %324 = vmatpush.msra.mxu0 0.0
    %325 = vmatpush.msra.mxu0 0.0
    %326 = vmatpush.msra.mxu0 0.0
    %327 = vmatpush.msra.mxu0 0.0
    %328 = vmatpush.msra.mxu0 0.0
    %329 = vmatpush.msra.mxu0 0.0
    %330 = vmatpush.msra.mxu0 0.0
    %331 = vmatpush.msra.mxu0 %v230
    %332 = vmatmul.f32.gmra.mxu0 %v314
    %v333 = vpop.f32.mrf.mxu0
    %v334 = vadd.f32 0.0, %v333
    %335 = vdwg.mxu0
    %v336 = vadd.f32 %v96, %v311
    %v337 = vadd.f32 %v97, %v334
    %338 = vadd.xlane.f32.xlu0 %v336
    %v339 = vpop.xlane.xlu0 %338
    %340 = vadd.xlane.f32.xlu0 %v337
    %v341 = vpop.xlane.xlu0 %340
    %v342 = vrcp.pop 128.0
    %v343 = vmul.f32 128.0, %v342
    %v344 = vsub.f32 1.0, %v343
    %v345 = vmul.f32 %v342, %v344
    %v346 = vadd.f32 %v342, %v345
    %vm347 = vweird.f32 %v342
    %v348 = vsel %vm347, %v342, %v346
    %v349 = vmul.f32 %v339, %v348
    %v350 = vmul.f32 %v341, %v348
    %v351 = vmul.f32 %v336, %v336
    %v352 = vmul.f32 %v337, %v337
    %353 = vadd.xlane.f32.xlu0 %v351
    %v354 = vpop.xlane.xlu0 %353
    %355 = vadd.xlane.f32.xlu0 %v352
    %v356 = vpop.xlane.xlu0 %355
    %v357 = vmul.f32 %v354, %v348
    %v358 = vmul.f32 %v356, %v348
    %v359 = vmul.f32 %v349, %v349
    %v360 = vmul.f32 %v350, %v350
    %v361 = vsub.f32 %v357, %v359
    %v362 = vsub.f32 %v358, %v360
    %v363 = vsub.f32 %v336, %v349
    %v364 = vsub.f32 %v337, %v350
    %v365 = vadd.f32 %v361, 1e-05
    %v366 = vadd.f32 %v362, 1e-05
    %v367 = vrsqrt.pop %v365
    %v368 = vmul.f32 %v367, %v365
    %v369 = vmul.f32 %v368, %v367
    %v370 = vmul.f32 0.5, %v369
    %v371 = vsub.f32 1.5, %v370
    %v372 = vmul.f32 %v367, %v371
    %vm373 = vweird.f32 %v365
    %vm374 = vweird.f32 %v367
    %vm375 = vmor %vm373, %vm374
    %v376 = vsel %vm375, %v367, %v372
    %v377 = vrsqrt.pop %v366
    %v378 = vmul.f32 %v377, %v366
    %v379 = vmul.f32 %v378, %v377
    %v380 = vmul.f32 0.5, %v379
    %v381 = vsub.f32 1.5, %v380
    %v382 = vmul.f32 %v377, %v381
    %vm383 = vweird.f32 %v366
    %vm384 = vweird.f32 %v377
    %vm385 = vmor %vm383, %vm384
    %v386 = vsel %vm385, %v377, %v382
    %v387 = vmul.f32 %v363, %v376
    %v388 = vmul.f32 %v364, %v386
    %v389 = vld [vmem:[%s7] sm:$0x1]
    %v391 = vperm.slane %v389, 0
    %v393 = vmul.f32 %v387, %v391
    %v394 = vmul.f32 %v388, %v391
    %v395 = vld [vmem:[%s8] sm:$0x1]
    %v397 = vperm.slane %v395, 0
    %v399 = vadd.f32 %v393, %v397
    %v400 = vadd.f32 %v394, %v397
    %401 = vst [vmem:[#allocation10] sm:$0xff] %v399
    %402 = vst [vmem:[#allocation10 + $0x8] sm:$0xff] %v400
    // Predicated region
    $region54: #{tpu_custom_call.1} parent=1 // pred_check
      _
    $region55: #{tpu_custom_call.1} parent=1 // pred_check_branch
      %404 = sbr.rel (0) target = $region57
    $region56: #{tpu_custom_call.1} parent=1 // pred_region
      %406 = vsyncadd [#allocation4], 0
      %s407 = sshll.u32 [#allocation10], 4
      %s408 = int_to_ptr.vmem [resolvable:$true] %s407
      %s409 = sshll.u32 %s9, 4
      %s410 = int_to_ptr.hbm [resolvable:$true] %s409
      %415 = dma.vmem_to_hbm [thread:$0]  %s408, 256, %s410, [#allocation4], 128, 128, 8
    $region57: #{tpu_custom_call.1} parent=1 // pred_fallthru
      _
    // Predicated region
    $region58: #{tpu_custom_call.1} parent=1 // pred_check
      _
    $region59: #{tpu_custom_call.1} parent=1 // pred_check_branch
      %417 = sbr.rel (0) target = $region61
    $region60: #{tpu_custom_call.1} parent=1 // pred_region
      %419 = dma.done [#allocation4], 256
    $region61: #{tpu_custom_call.1} parent=1 // pred_fallthru
      _
    %420 = vsyncpa [#allocation3], 1
    %421 = vsyncpa [#allocation6], 1
    %422 = vsyncpa [#allocation9], 1
    %423 = vsyncpa [#allocation4], 1

</llo_original>
